<compile_context>
chip_gen: v7x
topology: tpu7x:2x2x1
jax: 0.10.0
libtpu: 0.0.40
codegen_flags: <defaults>
</compile_context>

<pallas_src>
import functools

import jax
import jax.numpy as jnp
from jax.experimental import pallas as pl
from jax.experimental.pallas import tpu as pltpu


def _round_up(x, m):
    return ((x + m - 1) // m) * m


def _generator_kernel(x_ref, w_ref, bias_ref, o_ref, m_ref, l_ref, *, log_probs):
    phase = pl.program_id(1)   # 0: accumulate max / sum-exp stats, 1: write normalized output
    v = pl.program_id(2)       # vocab tile index

    # [tm, tv] logits for this vocab tile: MXU matmul in native dtype, f32 accumulation,
    # plus a broadcast additive mask row (padding_idx column / vocab-padding columns = -inf).
    logits = jnp.dot(x_ref[...], w_ref[...], preferred_element_type=jnp.float32)
    logits = logits + bias_ref[...]

    @pl.when(phase == 0)
    def _stats():
        @pl.when(v == 0)
        def _init():
            m_ref[...] = jnp.full_like(m_ref, -jnp.inf)
            l_ref[...] = jnp.zeros_like(l_ref)

        m_prev = m_ref[...]
        m_new = jnp.maximum(m_prev, jnp.max(logits, axis=-1, keepdims=True))
        alpha = jnp.exp(m_prev - m_new)               # 0 on the first tile (exp(-inf))
        l_ref[...] = l_ref[...] * alpha + jnp.sum(
            jnp.exp(logits - m_new), axis=-1, keepdims=True
        )
        m_ref[...] = m_new

    @pl.when(phase == 1)
    def _write():
        shifted = logits - m_ref[...]
        if log_probs:
            out = shifted - jnp.log(l_ref[...])
        else:
            out = jnp.exp(shifted) * pl.reciprocal(l_ref[...], approx=True)
        o_ref[...] = out.astype(o_ref.dtype)


def generator_forward(x, weight, *, padding_idx=-1, log_probs=True, tm=256, tv=2048):
    """x: (..., H) array (f32 or bf16). weight: (V, H) like torch nn.Linear.weight (no bias)."""
    orig_shape = x.shape
    H = orig_shape[-1]
    V = weight.shape[0]

    x2d = x.reshape(-1, H)
    M = x2d.shape[0]
    out_dtype = x.dtype  # output dtype follows the input (bf16 in -> bf16 log-probs out)

    # Row tile: MXU-friendly, clamped so tiny inputs don't pay huge padding waste.
    tm = min(tm, max(8, _round_up(M, 8)))
    M_pad = _round_up(M, tm)
    if M_pad != M:
        x2d = jnp.pad(x2d, ((0, M_pad - M), (0, 0)))

    # Vocab tile: multiple of 128, clamped to the 128-aligned vocab size.
    tv = min(_round_up(tv, 128), max(128, _round_up(V, 128)))
    V_pad = _round_up(V, tv)

    w_t = weight.T  # [H, V]
    if V_pad != V:
        w_t = jnp.pad(w_t, ((0, 0), (0, V_pad - V)))

    # Additive mask row: -inf at padding_idx (PyTorch `_pad_2d`) and at vocab padding columns.
    bias = jnp.zeros((1, V_pad), jnp.float32)
    if padding_idx >= 0:
        bias = bias.at[0, padding_idx].set(-jnp.inf)
    if V_pad != V:
        bias = bias.at[0, V:].set(-jnp.inf)

    kernel = functools.partial(_generator_kernel, log_probs=log_probs)
    nm, nv = M_pad // tm, V_pad // tv

    out2d = pl.pallas_call(
        kernel,
        out_shape=jax.ShapeDtypeStruct((M_pad, V_pad), out_dtype),
        grid_spec=pltpu.PrefetchScalarGridSpec(
            num_scalar_prefetch=0,
            grid=(nm, 2, nv),  # rows | phase (0: stats, 1: write) | vocab tiles
            in_specs=[
                pl.BlockSpec((tm, H), lambda i, p, v: (i, 0)),   # x row tile, resident across p,v
                pl.BlockSpec((H, tv), lambda i, p, v: (0, v)),   # weight vocab tile
                pl.BlockSpec((1, tv), lambda i, p, v: (0, v)),   # additive mask row
            ],
            # p*v parks the output block at (i, 0) during phase 0 (no garbage writeback);
            # phase 1 then streams the normalized tiles out.
            out_specs=pl.BlockSpec((tm, tv), lambda i, p, v: (i, p * v)),
            scratch_shapes=[
                pltpu.VMEM((tm, 1), jnp.float32),  # running max  m_i
                pltpu.VMEM((tm, 1), jnp.float32),  # running sum-exp l_i
            ],
        ),
        compiler_params=pltpu.CompilerParams(
            dimension_semantics=("parallel", "arbitrary", "arbitrary"),
            # TODO(synk): per-generation (v5e/v6e/v7x) tile tables; 64 MiB is a safe cap here.
            vmem_limit_bytes=64 * 1024 * 1024,
        ),
    )(x2d, w_t, bias)

    out2d = out2d[:M, :V]
    return out2d.reshape(*orig_shape[:-1], V)


def _reference(x, weight, padding_idx=-1, log_probs=True):
    logits = jnp.einsum("...h,vh->...v", x, weight)
    if padding_idx >= 0:
        mask = jnp.zeros((logits.shape[-1],), logits.dtype).at[padding_idx].set(-jnp.inf)
        logits = logits + mask
    if log_probs:
        return jax.nn.log_softmax(logits, axis=-1)
    return jax.nn.softmax(logits, axis=-1)


if __name__ == "__main__":
    # Small shapes consistent with the module: batch=2, seq=8, hidden=32, vocab=128.
    batch, seq, hidden, n_words = 2, 8, 32, 128

    key = jax.random.PRNGKey(0)
    kx, kw = jax.random.split(key)
    x = jax.random.normal(kx, (batch, seq, hidden), dtype=jnp.float32)
    # Deterministic "nn.Linear" weight [n_words, hidden], no bias.
    weight = (jax.random.normal(kw, (n_words, hidden), dtype=jnp.float32)
              * (1.0 / jnp.sqrt(hidden)))

    # Case 1: default module config (no padding mask, log-probs).
    out = generator_forward(x, weight, padding_idx=-1, log_probs=True)
    out = jax.block_until_ready(out)
    ref = _reference(x, weight, padding_idx=-1, log_probs=True)
    assert out.shape == (batch, seq, n_words)
    assert jnp.allclose(out, ref, atol=1e-4, rtol=1e-4), "log_softmax mismatch vs reference"

    # Case 2: padding mask + plain softmax path (approx reciprocal -> slightly looser tol).
    out2 = generator_forward(x, weight, padding_idx=5, log_probs=False)
    out2 = jax.block_until_ready(out2)
    ref2 = _reference(x, weight, padding_idx=5, log_probs=False)
    assert jnp.allclose(out2, ref2, atol=2e-3, rtol=2e-3), "softmax mismatch vs reference"

    print("KERNEL_OK")
</pallas_src>

<mosaic_0001>
module attributes {stable_mosaic.version = 11 : i64} {
  func.func @_generator_kernel(%arg0: i32, %arg1: i32, %arg2: i32, %arg3: memref<16x32xf32, #tpu.memory_space<vmem>>, %arg4: memref<32x128xf32, #tpu.memory_space<vmem>>, %arg5: memref<1x128xf32, #tpu.memory_space<vmem>>, %arg6: memref<16x128xf32, #tpu.memory_space<vmem>>, %arg7: memref<16x1xf32, #tpu.memory_space<vmem>>, %arg8: memref<16x1xf32, #tpu.memory_space<vmem>>) attributes {dimension_semantics = [#tpu.dimension_semantics<parallel>, #tpu.dimension_semantics<arbitrary>, #tpu.dimension_semantics<arbitrary>], iteration_bounds = array<i64: 1, 2, 1>, scalar_prefetch = 0 : i64, scratch_operands = 2 : i64, tpu.core_type = #tpu.core_type<tc>, window_params = [{transform_indices = @transform_0, window_bounds = array<i64: 16, 32>}, {transform_indices = @transform_1, window_bounds = array<i64: 32, 128>}, {transform_indices = @transform_2, window_bounds = array<i64: 1, 128>}, {transform_indices = @transform_3, window_bounds = array<i64: 16, 128>}]} {
    %c0 = arith.constant 0 : index
    %c0_0 = arith.constant 0 : index
    %0 = vector.load %arg3[%c0, %c0_0] : memref<16x32xf32, #tpu.memory_space<vmem>>, vector<16x32xf32>
    %c0_1 = arith.constant 0 : index
    %c0_2 = arith.constant 0 : index
    %1 = vector.load %arg4[%c0_1, %c0_2] : memref<32x128xf32, #tpu.memory_space<vmem>>, vector<32x128xf32>
    %cst = arith.constant dense<0.000000e+00> : vector<16x128xf32>
    %2 = tpu.matmul %0, %1, %cst {dimension_numbers = #tpu.dot_dimension_numbers<[1], [0], [0], [1], [0, 0, 1, 1], [], []>} : vector<16x32xf32>, vector<32x128xf32>, vector<16x128xf32> -> vector<16x128xf32>
    %c0_3 = arith.constant 0 : index
    %c0_4 = arith.constant 0 : index
    %3 = vector.load %arg5[%c0_3, %c0_4] : memref<1x128xf32, #tpu.memory_space<vmem>>, vector<1x128xf32>
    %4 = vector.broadcast %3 : vector<1x128xf32> to vector<16x128xf32>
    %5 = arith.addf %2, %4 : vector<16x128xf32>
    %c0_i32 = arith.constant 0 : i32
    %6 = arith.cmpi eq, %arg1, %c0_i32 : i32
    %7 = arith.extui %6 : i1 to i32
    %c0_i32_5 = arith.constant 0 : i32
    %8 = arith.cmpi ne, %7, %c0_i32_5 : i32
    scf.if %8 {
      %c0_i32_7 = arith.constant 0 : i32
      %12 = arith.cmpi eq, %arg2, %c0_i32_7 : i32
      %13 = arith.extui %12 : i1 to i32
      %c0_i32_8 = arith.constant 0 : i32
      %14 = arith.cmpi ne, %13, %c0_i32_8 : i32
      scf.if %14 {
        %cst_19 = arith.constant 0xFF800000 : f32
        %31 = vector.broadcast %cst_19 : f32 to vector<16x1xf32>
        %c0_20 = arith.constant 0 : index
        %c0_21 = arith.constant 0 : index
        %32 = vector.load %arg7[%c0_20, %c0_21] : memref<16x1xf32, #tpu.memory_space<vmem>>, vector<16x1xf32>
        tpu.vector_store %arg7[%c0_20, %c0_21], %31 {strides = array<i32>} : memref<16x1xf32, #tpu.memory_space<vmem>>, vector<16x1xf32>,
        %cst_22 = arith.constant 0.000000e+00 : f32
        %33 = vector.broadcast %cst_22 : f32 to vector<16x1xf32>
        %c0_23 = arith.constant 0 : index
        %c0_24 = arith.constant 0 : index
        %34 = vector.load %arg8[%c0_23, %c0_24] : memref<16x1xf32, #tpu.memory_space<vmem>>, vector<16x1xf32>
        tpu.vector_store %arg8[%c0_23, %c0_24], %33 {strides = array<i32>} : memref<16x1xf32, #tpu.memory_space<vmem>>, vector<16x1xf32>,
      } else {
      }
      %c0_9 = arith.constant 0 : index
      %c0_10 = arith.constant 0 : index
      %15 = vector.load %arg7[%c0_9, %c0_10] : memref<16x1xf32, #tpu.memory_space<vmem>>, vector<16x1xf32>
      %cst_11 = arith.constant dense<0xFF800000> : vector<16xf32>
      %16 = vector.multi_reduction <maximumf>, %5, %cst_11 [1] : vector<16x128xf32> to vector<16xf32>
      %17 = vector.shape_cast %16 : vector<16xf32> to vector<16x1xf32>
      %18 = arith.maximumf %15, %17 : vector<16x1xf32>
      %19 = arith.subf %15, %18 : vector<16x1xf32>
      %20 = math.exp %19 : vector<16x1xf32>
      %c0_12 = arith.constant 0 : index
      %c0_13 = arith.constant 0 : index
      %21 = vector.load %arg8[%c0_12, %c0_13] : memref<16x1xf32, #tpu.memory_space<vmem>>, vector<16x1xf32>
      %22 = arith.mulf %21, %20 : vector<16x1xf32>
      %23 = vector.broadcast %18 : vector<16x1xf32> to vector<16x128xf32>
      %24 = arith.subf %5, %23 : vector<16x128xf32>
      %25 = math.exp %24 : vector<16x128xf32>
      %cst_14 = arith.constant dense<0.000000e+00> : vector<16xf32>
      %26 = vector.multi_reduction <add>, %25, %cst_14 [1] : vector<16x128xf32> to vector<16xf32>
      %27 = vector.shape_cast %26 : vector<16xf32> to vector<16x1xf32>
      %28 = arith.addf %22, %27 : vector<16x1xf32>
      %c0_15 = arith.constant 0 : index
      %c0_16 = arith.constant 0 : index
      %29 = vector.load %arg8[%c0_15, %c0_16] : memref<16x1xf32, #tpu.memory_space<vmem>>, vector<16x1xf32>
      tpu.vector_store %arg8[%c0_15, %c0_16], %28 {strides = array<i32>} : memref<16x1xf32, #tpu.memory_space<vmem>>, vector<16x1xf32>,
      %c0_17 = arith.constant 0 : index
      %c0_18 = arith.constant 0 : index
      %30 = vector.load %arg7[%c0_17, %c0_18] : memref<16x1xf32, #tpu.memory_space<vmem>>, vector<16x1xf32>
      tpu.vector_store %arg7[%c0_17, %c0_18], %18 {strides = array<i32>} : memref<16x1xf32, #tpu.memory_space<vmem>>, vector<16x1xf32>,
    } else {
    }
    %c1_i32 = arith.constant 1 : i32
    %9 = arith.cmpi eq, %arg1, %c1_i32 : i32
    %10 = arith.extui %9 : i1 to i32
    %c0_i32_6 = arith.constant 0 : i32
    %11 = arith.cmpi ne, %10, %c0_i32_6 : i32
    scf.if %11 {
      %c0_7 = arith.constant 0 : index
      %c0_8 = arith.constant 0 : index
      %12 = vector.load %arg7[%c0_7, %c0_8] : memref<16x1xf32, #tpu.memory_space<vmem>>, vector<16x1xf32>
      %13 = vector.broadcast %12 : vector<16x1xf32> to vector<16x128xf32>
      %14 = arith.subf %5, %13 : vector<16x128xf32>
      %c0_9 = arith.constant 0 : index
      %c0_10 = arith.constant 0 : index
      %15 = vector.load %arg8[%c0_9, %c0_10] : memref<16x1xf32, #tpu.memory_space<vmem>>, vector<16x1xf32>
      %16 = math.log %15 : vector<16x1xf32>
      %17 = vector.broadcast %16 : vector<16x1xf32> to vector<16x128xf32>
      %18 = arith.subf %14, %17 : vector<16x128xf32>
      %c0_11 = arith.constant 0 : index
      %c0_12 = arith.constant 0 : index
      %19 = vector.load %arg6[%c0_11, %c0_12] : memref<16x128xf32, #tpu.memory_space<vmem>>, vector<16x128xf32>
      tpu.vector_store %arg6[%c0_11, %c0_12], %18 {strides = array<i32>} : memref<16x128xf32, #tpu.memory_space<vmem>>, vector<16x128xf32>,
    } else {
    }
    return
  }
  func.func @transform_0(%arg0: i32, %arg1: i32, %arg2: i32) -> (i32, i32) {
    %c0_i32 = arith.constant 0 : i32
    %c0_i32_0 = arith.constant 0 : i32
    return %arg0, %c0_i32 : i32, i32
  }
  func.func @transform_1(%arg0: i32, %arg1: i32, %arg2: i32) -> (i32, i32) {
    %c0_i32 = arith.constant 0 : i32
    %c0_i32_0 = arith.constant 0 : i32
    return %c0_i32, %arg2 : i32, i32
  }
  func.func @transform_2(%arg0: i32, %arg1: i32, %arg2: i32) -> (i32, i32) {
    %c0_i32 = arith.constant 0 : i32
    %c0_i32_0 = arith.constant 0 : i32
    return %c0_i32, %arg2 : i32, i32
  }
  func.func @transform_3(%arg0: i32, %arg1: i32, %arg2: i32) -> (i32, i32) {
    %0 = arith.muli %arg1, %arg2 : i32
    %c0_i32 = arith.constant 0 : i32
    return %arg0, %0 : i32, i32
  }
}

</mosaic_0001>

<llo_original>
// kernel: tpu_custom_call.1
$region0: #{tpu_custom_call.1}
  #allocation0 [shape = 'u32[]', space=smem, size = 0x4, offset = 0x4, fixed_abs, tag = 'smem constant byte address 0x4 - core index']
  #allocation1 [shape = 'u32[144,128]{1,0:T(1,128)}', space=vmem, size = 0x12000, scoped, tag = 'internal scratch']
  #allocation2 [shape = 'f32[16,1]{1,0:T(8,128)}', space=vmem, size = 0x2000, scoped, tag = 'scratch operand']
  #allocation3 [shape = 'f32[16,1]{1,0:T(8,128)}', space=vmem, size = 0x2000, scoped, tag = 'scratch operand']
  %s0 = inlined_call_operand.hbm [shape: f32[16,32], index: 0, kind: input, shape index: {}]
  %s1 = inlined_call_operand.hbm [shape: f32[32,128], index: 1, kind: input, shape index: {}]
  %s2 = inlined_call_operand.hbm [shape: f32[1,128], index: 2, kind: input, shape index: {}]
  %s3 = inlined_call_operand.hbm [shape: f32[16,128], index: 3, kind: output, shape index: {}]
  %s4 = sld [smem:[#allocation0]]
  $region69: #{tpu_custom_call.1} parent=0
    _
  %s6 = ssub.s32 1, %s4
  %s7 = scalar_select 0, %s6, %s4
  $region1: #{tpu_custom_call.1} parent=0
    #allocation4 [shape = 'u8[8192]{0}', space=vmem, size = 0x2000, scoped, tag = 'input window, operand 0, single buffered']
    #allocation5 [shape = 's32[2]{0}', space=sflag, size = 0x8, scoped, tag = 'scoped memory for tpu_custom_call.1']
    #allocation6 [shape = 's32[2]{0}', space=sflag, size = 0x8, scoped, tag = 'scoped memory for tpu_custom_call.1']
    #allocation7 [shape = 'u8[16384]{0}', space=vmem, size = 0x4000, scoped, tag = 'input window, operand 1, single buffered']
    #allocation8 [shape = 's32[1]{0}', space=sflag, size = 0x4, scoped, tag = 'scoped memory for tpu_custom_call.1']
    #allocation9 [shape = 'u8[512]{0}', space=vmem, size = 0x400, scoped, tag = 'input window, operand 2, single buffered']
    #allocation10 [shape = 'u8[16384]{0}', space=vmem, size = 0x4000, scoped, tag = 'output window, operand 0']
    %8 = vsyncpa [#allocation5], 0
    %9 = vsyncpa [#allocation8], 0
    %10 = vsyncpa [#allocation6], 0
    %s11 = scalar_lea.sflag [#allocation6], 1
    %12 = vsyncpa %s11, 0
    loop: start=0, step=1, limit=4
    $region2: #{tpu_custom_call.1} parent=1 // loop_pre_header
      _
    $region3: #{tpu_custom_call.1} parent=1 // loop_header
      %s14 = sphi 0, %s18
      %p15 = scmp.ge.s32.totalorder %s14, 4
      %s21 = sphi 0, %s40
      %s22 = sphi 0, %s36
      %s23 = sphi 0, %s32
      %s24 = sphi 0, %s21
      %s25 = sphi 0, %s22
      %s26 = sphi 0, %s23
      %s27 = sphi 0, %s24
      %s28 = sphi 0, %s25
      %s29 = sphi 0, %s26
      %s43 = sphi 0, %s45
      %s46 = sphi 0, %s43
      %s47 = sphi 0, %s46
      %s63 = sphi 0, %s47
      %s69 = sphi 0, %s71
      %s72 = sphi 0, %s69
      %s73 = sphi 0, %s72
      %s89 = sphi 0, %s73
      %s95 = sphi 0, %s97
      %s98 = sphi 0, %s95
      %s99 = sphi 0, %s98
      %s115 = sphi 0, %s99
      %s125 = sphi 0, %s127
      %s128 = sphi 0, %s125
      %s129 = sphi 0, %s128
      %s145 = sphi 0, %s129
    $region4: #{tpu_custom_call.1} parent=1 // loop_header_branch
      %17 = sbr.rel (%p15) target = $region8
    $region5: #{tpu_custom_call.1} parent=1 // loop_body
      %s19 = ssub.s32 %s14, 1
      %s20 = ssub.s32 %s14, 2
      %s30 = sadd.s32 1, %s23
      %p31 = scmp.ge.s32.totalorder %s30, 1
      %s32 = scalar_select %p31, 0, %s30
      %s33 = sadd.s32 1, %s22
      %s34 = scalar_select %p31, %s33, %s22
      %p35 = scmp.ge.s32.totalorder %s34, 2
      %s36 = scalar_select %p35, 0, %s34
      %s37 = sadd.s32 1, %s21
      %s38 = scalar_select %p35, %s37, %s21
      %p39 = scmp.ge.s32.totalorder %s38, 1
      %s40 = scalar_select %p39, 0, %s38
      %s41 = ssub.s32 %s21, %s40
      %p42 = scmp.eq.s32.totalorder %s41, 0
      %s44 = sadd.s32 %s43, 1
      %s45 = scalar_select %p42, %s43, %s44
      %p48 = pneg %p42
      %p49 = scmp.eq.s32.totalorder %s14, 1
      %p50 = por %p48, %p49
      %p51 = scmp.ne.s32.totalorder %s43, %s46
      %p52 = scmp.eq.s32.totalorder %s14, 0
      %p53 = por %p51, %p52
      %p54 = scmp.ne.s32.totalorder %s43, %s46
      %p55 = scmp.eq.s32.totalorder %s19, 1
      %p56 = por %p54, %p55
      %p57 = scmp.ne.s32.totalorder %s46, %s47
      %p58 = scmp.eq.s32.totalorder %s19, 0
      %p59 = por %p57, %p58
      %p60 = scmp.ne.s32.totalorder %s46, %s47
      %p61 = scmp.eq.s32.totalorder %s20, 1
      %p62 = por %p60, %p61
      %p64 = scmp.ne.s32.totalorder %s47, %s63
      %p65 = scmp.eq.s32.totalorder %s20, 0
      %p66 = por %p64, %p65
      %s67 = ssub.s32 %s23, %s32
      %p68 = scmp.eq.s32.totalorder %s67, 0
      %s70 = sadd.s32 %s69, 1
      %s71 = scalar_select %p68, %s69, %s70
      %p74 = pneg %p68
      %p75 = scmp.eq.s32.totalorder %s14, 1
      %p76 = por %p74, %p75
      %p77 = scmp.ne.s32.totalorder %s69, %s72
      %p78 = scmp.eq.s32.totalorder %s14, 0
      %p79 = por %p77, %p78
      %p80 = scmp.ne.s32.totalorder %s69, %s72
      %p81 = scmp.eq.s32.totalorder %s19, 1
      %p82 = por %p80, %p81
      %p83 = scmp.ne.s32.totalorder %s72, %s73
      %p84 = scmp.eq.s32.totalorder %s19, 0
      %p85 = por %p83, %p84
      %p86 = scmp.ne.s32.totalorder %s72, %s73
      %p87 = scmp.eq.s32.totalorder %s20, 1
      %p88 = por %p86, %p87
      %p90 = scmp.ne.s32.totalorder %s73, %s89
      %p91 = scmp.eq.s32.totalorder %s20, 0
      %p92 = por %p90, %p91
      %s93 = ssub.s32 %s23, %s32
      %p94 = scmp.eq.s32.totalorder %s93, 0
      %s96 = sadd.s32 %s95, 1
      %s97 = scalar_select %p94, %s95, %s96
      %p100 = pneg %p94
      %p101 = scmp.eq.s32.totalorder %s14, 1
      %p102 = por %p100, %p101
      %p103 = scmp.ne.s32.totalorder %s95, %s98
      %p104 = scmp.eq.s32.totalorder %s14, 0
      %p105 = por %p103, %p104
      %p106 = scmp.ne.s32.totalorder %s95, %s98
      %p107 = scmp.eq.s32.totalorder %s19, 1
      %p108 = por %p106, %p107
      %p109 = scmp.ne.s32.totalorder %s98, %s99
      %p110 = scmp.eq.s32.totalorder %s19, 0
      %p111 = por %p109, %p110
      %p112 = scmp.ne.s32.totalorder %s98, %s99
      %p113 = scmp.eq.s32.totalorder %s20, 1
      %p114 = por %p112, %p113
      %p116 = scmp.ne.s32.totalorder %s99, %s115
      %p117 = scmp.eq.s32.totalorder %s20, 0
      %p118 = por %p116, %p117
      %s119 = smul.u32 %s22, %s23
      %s120 = smul.u32 %s36, %s32
      %s121 = ssub.s32 %s21, %s40
      %s122 = ssub.s32 %s119, %s120
      %s123 = sor.u32 %s121, %s122
      %p124 = scmp.eq.s32.totalorder %s123, 0
      %s126 = sadd.s32 %s125, 1
      %s127 = scalar_select %p124, %s125, %s126
      %p130 = pneg %p124
      %p131 = scmp.eq.s32.totalorder %s14, 1
      %p132 = por %p130, %p131
      %p133 = scmp.ne.s32.totalorder %s125, %s128
      %p134 = scmp.eq.s32.totalorder %s14, 0
      %p135 = por %p133, %p134
      %p136 = scmp.ne.s32.totalorder %s125, %s128
      %p137 = scmp.eq.s32.totalorder %s19, 1
      %p138 = por %p136, %p137
      %p139 = scmp.ne.s32.totalorder %s128, %s129
      %p140 = scmp.eq.s32.totalorder %s19, 0
      %p141 = por %p139, %p140
      %p142 = scmp.ne.s32.totalorder %s128, %s129
      %p143 = scmp.eq.s32.totalorder %s20, 1
      %p144 = por %p142, %p143
      %p146 = scmp.ne.s32.totalorder %s129, %s145
      %p147 = scmp.eq.s32.totalorder %s20, 0
      %p148 = por %p146, %p147
      %p149 = scmp.le.s32.totalorder 1, %s14
      %p150 = scmp.lt.s32.totalorder %s14, 3
      %p151 = pnand %p149, %p150
      %p152 = pneg %p151
      // Predicated region
      $region9: #{tpu_custom_call.1} parent=5 // pred_check
        _
      $region10: #{tpu_custom_call.1} parent=5 // pred_check_branch
        %154 = sbr.rel (%p151) target = $region12
      $region11: #{tpu_custom_call.1} parent=5 // pred_region
        %s155 = ssub.s32 %s14, 1
        // Predicated region
        $region13: #{tpu_custom_call.1} parent=11 // pred_check
          %p156 = pneg %p59
        $region14: #{tpu_custom_call.1} parent=11 // pred_check_branch
          %158 = sbr.rel (%p156) target = $region16
        $region15: #{tpu_custom_call.1} parent=11 // pred_region
          %s159 = smul.u32 2, %s24
          %s161 = ssub.s32 256, 256
          %162 = vsyncadd [#allocation5], %s161
          %s163 = smul.addr %s159, 128
          %s164 = scalar_lea.hbm %s0, %s163
          %s165 = sshll.u32 [#allocation4], 4
          %s166 = int_to_ptr.vmem [resolvable:$true] %s165
          %171 = dma.hbm_to_vmem [thread:$0]  %s164, 256, %s166, [#allocation5], 128, 128, 8
        $region16: #{tpu_custom_call.1} parent=11 // pred_fallthru
          _
        // Predicated region
        $region17: #{tpu_custom_call.1} parent=11 // pred_check
          %p172 = pneg %p85
        $region18: #{tpu_custom_call.1} parent=11 // pred_check_branch
          %174 = sbr.rel (%p172) target = $region20
        $region19: #{tpu_custom_call.1} parent=11 // pred_region
          %s176 = ssub.s32 512, 512
          %177 = vsyncadd [#allocation8], %s176
          %s178 = smul.addr %s26, 128
          %s179 = scalar_lea.hbm %s1, %s178
          %s180 = sshll.u32 [#allocation7], 4
          %s181 = int_to_ptr.vmem [resolvable:$true] %s180
          %186 = dma.hbm_to_vmem [thread:$0]  %s179, 512, %s181, [#allocation8], 128, 128, 8
        $region20: #{tpu_custom_call.1} parent=11 // pred_fallthru
          _
        // Predicated region
        $region21: #{tpu_custom_call.1} parent=11 // pred_check
          %p187 = pneg %p111
        $region22: #{tpu_custom_call.1} parent=11 // pred_check_branch
          %189 = sbr.rel (%p187) target = $region24
        $region23: #{tpu_custom_call.1} parent=11 // pred_region
          %s191 = ssub.s32 16, 16
          %192 = vsyncadd [#allocation8], %s191
          %s193 = smul.addr %s26, 16
          %s194 = scalar_lea.hbm %s2, %s193
          %s196 = sshll.u32 [#allocation9], 4
          %s197 = int_to_ptr.vmem [resolvable:$true] %s196
          %199 = dma.hbm_to_vmem [thread:$0]  %s194, 16, %s197, [#allocation8]
        $region24: #{tpu_custom_call.1} parent=11 // pred_fallthru
          _
      $region12: #{tpu_custom_call.1} parent=5 // pred_fallthru
        _
      %p200 = scmp.lt.s32.totalorder %s14, 2
      // Predicated region
      $region25: #{tpu_custom_call.1} parent=5 // pred_check
        %p201 = pneg %p200
      $region26: #{tpu_custom_call.1} parent=5 // pred_check_branch
        %203 = sbr.rel (%p201) target = $region28
      $region27: #{tpu_custom_call.1} parent=5 // pred_region
        _
      $region28: #{tpu_custom_call.1} parent=5 // pred_fallthru
        _
      %p204 = scmp.le.s32.totalorder 1, %s14
      %p205 = scmp.lt.s32.totalorder %s14, 3
      %p206 = pnand %p204, %p205
      %p207 = pneg %p206
      // Predicated region
      $region29: #{tpu_custom_call.1} parent=5 // pred_check
        _
      $region30: #{tpu_custom_call.1} parent=5 // pred_check_branch
        %209 = sbr.rel (%p206) target = $region32
      $region31: #{tpu_custom_call.1} parent=5 // pred_region
        %s210 = ssub.s32 %s14, 1
        // Predicated region
        $region33: #{tpu_custom_call.1} parent=31 // pred_check
          %p211 = pneg %p59
        $region34: #{tpu_custom_call.1} parent=31 // pred_check_branch
          %213 = sbr.rel (%p211) target = $region36
        $region35: #{tpu_custom_call.1} parent=31 // pred_region
          %214 = dma.done [#allocation5], 256
        $region36: #{tpu_custom_call.1} parent=31 // pred_fallthru
          _
        // Predicated region
        $region37: #{tpu_custom_call.1} parent=31 // pred_check
          %p215 = pneg %p85
        $region38: #{tpu_custom_call.1} parent=31 // pred_check_branch
          %217 = sbr.rel (%p215) target = $region40
        $region39: #{tpu_custom_call.1} parent=31 // pred_region
          %218 = dma.done [#allocation8], 512
        $region40: #{tpu_custom_call.1} parent=31 // pred_fallthru
          _
        // Predicated region
        $region41: #{tpu_custom_call.1} parent=31 // pred_check
          %p219 = pneg %p111
        $region42: #{tpu_custom_call.1} parent=31 // pred_check_branch
          %221 = sbr.rel (%p219) target = $region44
        $region43: #{tpu_custom_call.1} parent=31 // pred_region
          %222 = dma.done [#allocation8], 16
        $region44: #{tpu_custom_call.1} parent=31 // pred_fallthru
          _
        %p223 = pneg %p59
        %p224 = pneg %p56
        %p225 = pneg %p85
        %p226 = pneg %p82
        %p227 = pneg %p111
        %p228 = pneg %p108
        %p229 = pneg %p141
        %p230 = pneg %p138
        %s231 = sand.u32 %s128, 1
        %s232 = scalar_lea.sflag [#allocation6], %s231
        %s233 = sand.u32 %s128, 1
        %s234 = smul.addr %s233, 16
        %s235 = scalar_lea.vmem [#allocation10], %s234
        %s236 = smul.u32 2, %s24
        %s237 = smul.u32 %s25, %s26
        %s238 = smul.u32 2, %s24
        %v239 = vld [vmem:[#allocation4] sm:$0xff]
        %v240 = vld [vmem:[#allocation4 + $0x8] sm:$0xff]
        %v241 = vld [vmem:[#allocation7] sm:$0xff]
        %v242 = vld [vmem:[#allocation7 + $0x8] sm:$0xff]
        %v243 = vld [vmem:[#allocation7 + $0x10] sm:$0xff]
        %v244 = vld [vmem:[#allocation7 + $0x18] sm:$0xff]
        %v245 = vld [vmem:[#allocation9] sm:$0x1]
        %v247 = vlaneseq
        %v248 = vshrl.u32 %v247, 7
        %v249 = vsub.s32 0, %v248
        %v250 = vrot.slane %v245, %v249
        %vm252 = vcmask 261120
        %v254 = vsel %vm252, %v239, 0
        %v257 = vsel %vm252, %v240, 0
        %259 = vmatprep.subr.mxu0 0.0
        %260 = vmatpush1.msra.mxu0 %v241
        %261 = vmatprep.subr.mxu0 0.0
        %262 = vmatpush1.msra.mxu0 %v242
        %263 = vmatprep.subr.mxu0 0.0
        %264 = vmatpush1.msra.mxu0 %v243
        %265 = vmatprep.subr.mxu0 0.0
        %266 = vmatpush1.msra.mxu0 %v244
        %267 = vmatprep.subr.mxu0 0.0
        %268 = vmatpush1.msra.mxu0 0.0
        %269 = vmatprep.subr.mxu0 0.0
        %270 = vmatpush1.msra.mxu0 0.0
        %271 = vmatprep.subr.mxu0 0.0
        %272 = vmatpush1.msra.mxu0 0.0
        %273 = vmatprep.subr.mxu0 0.0
        %274 = vmatpush1.msra.mxu0 0.0
        %275 = vmatprep.subr.mxu0 0.0
        %276 = vmatpush1.msra.mxu0 0.0
        %277 = vmatprep.subr.mxu0 0.0
        %278 = vmatpush1.msra.mxu0 0.0
        %279 = vmatprep.subr.mxu0 0.0
        %280 = vmatpush1.msra.mxu0 0.0
        %281 = vmatprep.subr.mxu0 0.0
        %282 = vmatpush1.msra.mxu0 0.0
        %283 = vmatprep.subr.mxu0 0.0
        %284 = vmatpush1.msra.mxu0 0.0
        %285 = vmatprep.subr.mxu0 0.0
        %286 = vmatpush1.msra.mxu0 0.0
        %287 = vmatprep.subr.mxu0 0.0
        %288 = vmatpush1.msra.mxu0 0.0
        %289 = vmatprep.subr.mxu0 0.0
        %290 = vmatpush1.msra.mxu0 0.0
        %291 = vmatprep.subr.mxu0 0.0
        %292 = vmatpush1.msra.mxu0 0.0
        %293 = vmatprep.subr.mxu0 0.0
        %294 = vmatpush1.msra.mxu0 0.0
        %295 = vmatprep.subr.mxu0 0.0
        %296 = vmatpush1.msra.mxu0 0.0
        %297 = vmatprep.subr.mxu0 0.0
        %298 = vmatpush1.msra.mxu0 0.0
        %299 = vmatprep.subr.mxu0 0.0
        %300 = vmatpush1.msra.mxu0 0.0
        %301 = vmatprep.subr.mxu0 0.0
        %302 = vmatpush1.msra.mxu0 0.0
        %303 = vmatprep.subr.mxu0 0.0
        %304 = vmatpush1.msra.mxu0 0.0
        %305 = vmatprep.subr.mxu0 0.0
        %306 = vmatpush1.msra.mxu0 0.0
        %307 = vmatprep.subr.mxu0 0.0
        %308 = vmatpush1.msra.mxu0 0.0
        %309 = vmatprep.subr.mxu0 0.0
        %310 = vmatpush1.msra.mxu0 0.0
        %311 = vmatprep.subr.mxu0 0.0
        %312 = vmatpush1.msra.mxu0 0.0
        %313 = vmatprep.subr.mxu0 0.0
        %314 = vmatpush1.msra.mxu0 0.0
        %315 = vmatprep.subr.mxu0 0.0
        %316 = vmatpush1.msra.mxu0 0.0
        %317 = vmatprep.subr.mxu0 0.0
        %318 = vmatpush1.msra.mxu0 0.0
        %319 = vmatprep.subr.mxu0 0.0
        %320 = vmatpush1.msra.mxu0 0.0
        %321 = vmatprep.subr.mxu0 0.0
        %322 = vmatpush1.msra.mxu0 0.0
        %323 = vmatprep.mubr.f32.mxu0 0.0
        %324 = vmatmul.mubr.f32.gmra.mrb[0].mxu0 %v254
        %v325 = vpop.f32.mrb[0].mxu0
        %v326 = vadd.f32 %v250, %v325
        %v327 = vpop.f32.mrb[0].mxu0
        %328 = vmatprep.mubr.f32.mxu0 0.0
        %329 = vmatmul.mubr.f32.gmra.mrb[0].mxu0 %v257
        %v330 = vpop.f32.mrb[0].mxu0
        %v331 = vadd.f32 %v250, %v330
        %v332 = vpop.f32.mrb[0].mxu0
        %333 = vdwg.mxu0
        %p334 = scmp.eq.s32.totalorder %s25, 0
        // Predicated region
        $region45: #{tpu_custom_call.1} parent=31 // pred_check
          %p335 = pneg %p334
        $region46: #{tpu_custom_call.1} parent=31 // pred_check_branch
          %337 = sbr.rel (%p335) target = $region48
        $region47: #{tpu_custom_call.1} parent=31 // pred_region
          %p338 = scmp.eq.s32.totalorder %s26, 0
          // Predicated region
          $region49: #{tpu_custom_call.1} parent=47 // pred_check
            %p339 = pneg %p338
          $region50: #{tpu_custom_call.1} parent=47 // pred_check_branch
            %341 = sbr.rel (%p339) target = $region52
          $region51: #{tpu_custom_call.1} parent=47 // pred_region
            %vm342 = vcmask 7168
            %343 = vst.msk [vmem:[#allocation2] sm:$0xff] %vm342, -inf
            %344 = vst.msk [vmem:[#allocation2 + $0x8] sm:$0xff] %vm342, -inf
            %345 = vst.msk [vmem:[#allocation3] sm:$0xff] %vm342, 0.0
            %346 = vst.msk [vmem:[#allocation3 + $0x8] sm:$0xff] %vm342, 0.0
          $region52: #{tpu_custom_call.1} parent=47 // pred_fallthru
            _
          %v347 = vld [vmem:[#allocation2] sm:$0xff]
          %v348 = vld [vmem:[#allocation2 + $0x8] sm:$0xff]
          %349 = vmax.xlane.f32.xlu0 %v326
          %v350 = vpop.xlane.xlu0 %349
          %351 = vmax.xlane.f32.xlu0 %v331
          %v352 = vpop.xlane.xlu0 %351
          %v353 = vmax.f32 %v347, %v350
          %v354 = vmax.f32 %v348, %v352
          %v355 = vsub.f32 %v347, %v353
          %v356 = vsub.f32 %v348, %v354
          %v357 = vmul.f32 %v355, 1.442695
          %v358 = vpow.pop %v357
          %v359 = vmul.f32 %v356, 1.442695
          %v360 = vpow.pop %v359
          %v361 = vld [vmem:[#allocation3] sm:$0xff]
          %v362 = vld [vmem:[#allocation3 + $0x8] sm:$0xff]
          %v363 = vmul.f32 %v361, %v358
          %v364 = vmul.f32 %v362, %v360
          %366 = vset.pattern.permute.xlu0 0
          %367 = vperm.xlu0 %366, %v353
          %v368 = vpop.permute.xlu0 %367
          %371 = vset.pattern.permute.xlu0 0
          %372 = vperm.xlu0 %371, %v354
          %v373 = vpop.permute.xlu0 %372
          %v375 = vsub.f32 %v326, %v368
          %v376 = vsub.f32 %v331, %v373
          %v377 = vmul.f32 %v375, 1.442695
          %v378 = vpow.pop %v377
          %v379 = vmul.f32 %v376, 1.442695
          %v380 = vpow.pop %v379
          %381 = vadd.xlane.f32.xlu0 %v378
          %v382 = vpop.xlane.xlu0 %381
          %383 = vadd.xlane.f32.xlu0 %v380
          %v384 = vpop.xlane.xlu0 %383
          %v385 = vadd.f32 %v363, %v382
          %v386 = vadd.f32 %v364, %v384
          %vm387 = vcmask 7168
          %388 = vst.msk [vmem:[#allocation3] sm:$0xff] %vm387, %v385
          %389 = vst.msk [vmem:[#allocation3 + $0x8] sm:$0xff] %vm387, %v386
          %390 = vst.msk [vmem:[#allocation2] sm:$0xff] %vm387, %v353
          %391 = vst.msk [vmem:[#allocation2 + $0x8] sm:$0xff] %vm387, %v354
        $region48: #{tpu_custom_call.1} parent=31 // pred_fallthru
          _
        %p392 = scmp.eq.s32.totalorder %s25, 1
        // Predicated region
        $region53: #{tpu_custom_call.1} parent=31 // pred_check
          %p393 = pneg %p392
        $region54: #{tpu_custom_call.1} parent=31 // pred_check_branch
          %395 = sbr.rel (%p393) target = $region56
        $region55: #{tpu_custom_call.1} parent=31 // pred_region
          %v396 = vld [vmem:[#allocation2] sm:$0xff]
          %v397 = vld [vmem:[#allocation2 + $0x8] sm:$0xff]
          %399 = vset.pattern.permute.xlu0 0
          %400 = vperm.xlu0 %399, %v396
          %v401 = vpop.permute.xlu0 %400
          %404 = vset.pattern.permute.xlu0 0
          %405 = vperm.xlu0 %404, %v397
          %v406 = vpop.permute.xlu0 %405
          %v408 = vsub.f32 %v326, %v401
          %v409 = vsub.f32 %v331, %v406
          %v410 = vld [vmem:[#allocation3] sm:$0xff]
          %v411 = vld [vmem:[#allocation3 + $0x8] sm:$0xff]
          %v412 = vlog2.pop %v410
          %v413 = vmul.f32 %v412, 0.6931472
          %v414 = vlog2.pop %v411
          %v415 = vmul.f32 %v414, 0.6931472
          %417 = vset.pattern.permute.xlu0 0
          %418 = vperm.xlu0 %417, %v413
          %v419 = vpop.permute.xlu0 %418
          %422 = vset.pattern.permute.xlu0 0
          %423 = vperm.xlu0 %422, %v415
          %v424 = vpop.permute.xlu0 %423
          %v426 = vsub.f32 %v408, %v419
          %v427 = vsub.f32 %v409, %v424
          %428 = vst [vmem:[%s235] sm:$0xff] %v426
          %429 = vst [vmem:[%s235 + $0x8] sm:$0xff] %v427
        $region56: #{tpu_custom_call.1} parent=31 // pred_fallthru
          _
        %s430 = sand.u32 %s128, 1
        %s431 = scalar_lea.sflag [#allocation6], %s430
        %s432 = sand.u32 %s128, 1
        %s433 = smul.addr %s432, 16
        %s434 = scalar_lea.vmem [#allocation10], %s433
        // Predicated region
        $region57: #{tpu_custom_call.1} parent=31 // pred_check
          %p435 = pneg %p138
        $region58: #{tpu_custom_call.1} parent=31 // pred_check_branch
          %437 = sbr.rel (%p435) target = $region60
        $region59: #{tpu_custom_call.1} parent=31 // pred_region
          %s438 = smul.u32 %s25, %s26
          %s439 = smul.u32 2, %s24
          %s441 = ssub.s32 256, 256
          %442 = vsyncadd %s431, %s441
          %s443 = sadd.s32 %s438, %s439
          %s444 = smul.addr %s443, 128
          %s445 = scalar_lea.hbm %s3, %s444
          %s446 = sshll.u32 %s434, 4
          %s447 = int_to_ptr.vmem [resolvable:$true] %s446
          %452 = dma.vmem_to_hbm [thread:$0]  %s447, 256, %s445, %s431, 128, 128, 8
        $region60: #{tpu_custom_call.1} parent=31 // pred_fallthru
          _
      $region32: #{tpu_custom_call.1} parent=5 // pred_fallthru
        _
      %p453 = scmp.le.s32.totalorder 2, %s14
      // Predicated region
      $region61: #{tpu_custom_call.1} parent=5 // pred_check
        %p454 = pneg %p453
      $region62: #{tpu_custom_call.1} parent=5 // pred_check_branch
        %456 = sbr.rel (%p454) target = $region64
      $region63: #{tpu_custom_call.1} parent=5 // pred_region
        %s457 = ssub.s32 %s14, 2
        // Predicated region
        $region65: #{tpu_custom_call.1} parent=63 // pred_check
          %p458 = pneg %p144
        $region66: #{tpu_custom_call.1} parent=63 // pred_check_branch
          %460 = sbr.rel (%p458) target = $region68
        $region67: #{tpu_custom_call.1} parent=63 // pred_region
          %s461 = sand.u32 %s129, 1
          %s462 = scalar_lea.sflag [#allocation6], %s461
          %s463 = sand.u32 %s129, 1
          %s464 = smul.addr %s463, 16
          %s465 = scalar_lea.vmem [#allocation10], %s464
          %466 = dma.done %s462, 256
        $region68: #{tpu_custom_call.1} parent=63 // pred_fallthru
          _
      $region64: #{tpu_custom_call.1} parent=5 // pred_fallthru
        _
    $region6: #{tpu_custom_call.1} parent=1 // loop_footer
      %s18 = sadd.s32 1, %s14
    $region7: #{tpu_custom_call.1} parent=1 // loop_footer_branch
      %13 = sbr.rel target = $region3
    $region8: #{tpu_custom_call.1} parent=1 // loop_exit
      _
    %467 = vsyncpa [#allocation5], 1
    %s468 = scalar_lea.sflag [#allocation5], 1
    %469 = vsyncpa %s468, 1
    %470 = vsyncpa [#allocation8], 1
    %471 = vsyncpa [#allocation6], 1
    %s472 = scalar_lea.sflag [#allocation6], 1
    %473 = vsyncpa %s472, 1

</llo_original>
